<compile_context>
chip_gen: v6e
topology: v6e:2x2x1
jax: 0.10.0
libtpu: 0.0.40
codegen_flags: <defaults>
</compile_context>

<pallas_src>
import functools
import math

import jax
import jax.numpy as jnp
from jax import lax
from jax.experimental import pallas as pl
from jax.experimental.pallas import tpu as pltpu


HIDDEN = 768
HEADS = 12
HEAD_DIM = HIDDEN // HEADS
INTER = 3072
LAYERS = 2          # reduced from 12 for a small, fast synthetic run
VOCAB = 128
MAX_POS = 64
N_CLASSES = 4
LOGIT_PAD = 128     # lane-dense padded classifier width (sliced to 4 in glue)
LN_EPS = 1e-12


def _pick_tm(m):
    """Row tile for LN-style kernels: try to expose >=2 parallel grid steps."""
    if m % 256 == 0:
        return 256
    if m >= 16 and m % 16 == 0:
        return m // 2
    return m


def _gelu(y):
    # TODO(synk): HF BertIntermediate defaults to exact erf GELU; this is the tanh approx.
    return 0.5 * y * (1.0 + jnp.tanh(0.7978845608028654 * (y + 0.044715 * y * y * y)))


# ---------------------------------------------------------------------------
# Pallas kernels
# ---------------------------------------------------------------------------

def _linear_kernel(x_ref, w_ref, b_ref, o_ref, *, act):
    """o = act(x @ w + b) for one N-tile (bf16 in, f32 accumulate)."""
    y = jnp.dot(x_ref[...], w_ref[...], preferred_element_type=jnp.float32)
    y = y + b_ref[...]
    if act == "gelu":
        y = _gelu(y)
    o_ref[...] = y.astype(o_ref.dtype)


def linear(x, w, b, act="none", tile_n=256, out_dtype=jnp.bfloat16):
    """x:[M,K] @ w:[K,N] + b:[N], tiled over N."""
    M, K = x.shape
    _, N = w.shape
    tn = tile_n if (N >= tile_n and N % tile_n == 0) else N
    return pl.pallas_call(
        functools.partial(_linear_kernel, act=act),
        out_shape=jax.ShapeDtypeStruct((M, N), out_dtype),
        grid_spec=pltpu.PrefetchScalarGridSpec(
            num_scalar_prefetch=0,
            grid=(N // tn,),
            in_specs=[
                pl.BlockSpec((M, K), lambda j: (0, 0)),
                pl.BlockSpec((K, tn), lambda j: (0, j)),
                pl.BlockSpec((1, tn), lambda j: (0, j)),
            ],
            out_specs=pl.BlockSpec((M, tn), lambda j: (0, j)),
        ),
        compiler_params=pltpu.CompilerParams(
            dimension_semantics=("parallel",),
            vmem_limit_bytes=32 << 20,
        ),
    )(x, w, b.reshape(1, N))


def _linear_add_ln_kernel(x_ref, w_ref, b_ref, r_ref, g_ref, be_ref, o_ref, *, eps):
    """o = LayerNorm((x @ w + b) + residual) * g + be, stats in f32."""
    y = jnp.dot(x_ref[...], w_ref[...], preferred_element_type=jnp.float32)
    h = y + b_ref[...] + r_ref[...].astype(jnp.float32)
    mu = jnp.mean(h, axis=-1, keepdims=True)
    d = h - mu
    var = jnp.mean(d * d, axis=-1, keepdims=True)
    inv = lax.rsqrt(var + eps)
    o_ref[...] = (d * inv * g_ref[...] + be_ref[...]).astype(o_ref.dtype)


def linear_add_layernorm(x, w, b, resid, g, beta, out_dtype=jnp.bfloat16):
    """Fused matmul + residual add + LayerNorm, tiled over rows (full N per block)."""
    M, K = x.shape
    _, N = w.shape
    tm = _pick_tm(M)
    return pl.pallas_call(
        functools.partial(_linear_add_ln_kernel, eps=LN_EPS),
        out_shape=jax.ShapeDtypeStruct((M, N), out_dtype),
        grid_spec=pltpu.PrefetchScalarGridSpec(
            num_scalar_prefetch=0,
            grid=(M // tm,),
            in_specs=[
                pl.BlockSpec((tm, K), lambda i: (i, 0)),
                pl.BlockSpec((K, N), lambda i: (0, 0)),
                pl.BlockSpec((1, N), lambda i: (0, 0)),
                pl.BlockSpec((tm, N), lambda i: (i, 0)),
                pl.BlockSpec((1, N), lambda i: (0, 0)),
                pl.BlockSpec((1, N), lambda i: (0, 0)),
            ],
            out_specs=pl.BlockSpec((tm, N), lambda i: (i, 0)),
        ),
        compiler_params=pltpu.CompilerParams(
            dimension_semantics=("parallel",),
            vmem_limit_bytes=32 << 20,
        ),
    )(x, w, b.reshape(1, N), resid, g.reshape(1, N), beta.reshape(1, N))


def _ln_kernel(x_ref, g_ref, b_ref, o_ref, *, eps):
    h = x_ref[...].astype(jnp.float32)
    mu = jnp.mean(h, axis=-1, keepdims=True)
    d = h - mu
    var = jnp.mean(d * d, axis=-1, keepdims=True)
    inv = lax.rsqrt(var + eps)
    o_ref[...] = (d * inv * g_ref[...] + b_ref[...]).astype(o_ref.dtype)


def layernorm(x, g, b, out_dtype=jnp.bfloat16):
    M, H = x.shape
    tm = _pick_tm(M)
    return pl.pallas_call(
        functools.partial(_ln_kernel, eps=LN_EPS),
        out_shape=jax.ShapeDtypeStruct((M, H), out_dtype),
        grid_spec=pltpu.PrefetchScalarGridSpec(
            num_scalar_prefetch=0,
            grid=(M // tm,),
            in_specs=[
                pl.BlockSpec((tm, H), lambda i: (i, 0)),
                pl.BlockSpec((1, H), lambda i: (0, 0)),
                pl.BlockSpec((1, H), lambda i: (0, 0)),
            ],
            out_specs=pl.BlockSpec((tm, H), lambda i: (i, 0)),
        ),
        compiler_params=pltpu.CompilerParams(dimension_semantics=("parallel",)),
    )(x, g.reshape(1, H), b.reshape(1, H))


def _attn_kernel(q_ref, k_ref, v_ref, mb_ref, o_ref, *, scale):
    """Per (batch, head) attention: softmax(q k^T * scale + mask_bias) v."""
    q = q_ref[...]          # (S, D) bf16
    k = k_ref[...]          # (S, D) bf16
    v = v_ref[...]          # (S, D) bf16
    # Contraction on D, f32 accumulation.
    s = lax.dot_general(q, k, (((1,), (1,)), ((), ())),
                        preferred_element_type=jnp.float32) * scale
    s = s + mb_ref[...]     # (S, S) + (1, S) additive key-mask bias
    m = jnp.max(s, axis=-1, keepdims=True)
    p = jnp.exp(s - m)
    l = jnp.sum(p, axis=-1, keepdims=True)
    p = p * pl.reciprocal(l, approx=True)
    o = jnp.dot(p.astype(v.dtype), v, preferred_element_type=jnp.float32)
    o_ref[...] = o.astype(o_ref.dtype)


def attention(q, k, v, mask_bias):
    B, H, S, D = q.shape
    return pl.pallas_call(
        functools.partial(_attn_kernel, scale=1.0 / math.sqrt(D)),
        out_shape=jax.ShapeDtypeStruct((B, H, S, D), q.dtype),
        grid_spec=pltpu.PrefetchScalarGridSpec(
            num_scalar_prefetch=0,
            grid=(B, H),
            in_specs=[
                pl.BlockSpec((None, None, S, D), lambda b, h: (b, h, 0, 0)),
                pl.BlockSpec((None, None, S, D), lambda b, h: (b, h, 0, 0)),
                pl.BlockSpec((None, None, S, D), lambda b, h: (b, h, 0, 0)),
                pl.BlockSpec((None, 1, S), lambda b, h: (b, 0, 0)),
            ],
            out_specs=pl.BlockSpec((None, None, S, D), lambda b, h: (b, h, 0, 0)),
        ),
        compiler_params=pltpu.CompilerParams(
            dimension_semantics=("parallel", "parallel")),
    )(q, k, v, mask_bias)


def _pool_cls_kernel(x_ref, pw_ref, pb_ref, cw_ref, cb_ref, o_ref):
    """pooled = tanh(cls @ pool_w + pool_b); logits = relu(pooled @ cls_w_pad + cls_b_pad)."""
    pooled = jnp.dot(x_ref[...], pw_ref[...], preferred_element_type=jnp.float32)
    pooled = jnp.tanh(pooled + pb_ref[...])
    # TODO(synk): nn.Dropout(0.5) is identity under eval/inference semantics; training-mode
    # dropout would use pltpu.prng_seed + pltpu.stateful_bernoulli here.
    logits = jnp.dot(pooled.astype(cw_ref.dtype), cw_ref[...],
                     preferred_element_type=jnp.float32) + cb_ref[...]
    o_ref[...] = jnp.maximum(logits, 0.0).astype(o_ref.dtype)


def pooler_classifier(cls_tok, pool_w, pool_b, cls_w_pad, cls_b_pad):
    B, H = cls_tok.shape
    P = cls_w_pad.shape[1]
    return pl.pallas_call(
        _pool_cls_kernel,
        out_shape=jax.ShapeDtypeStruct((B, P), jnp.float32),
        grid_spec=pltpu.PrefetchScalarGridSpec(
            num_scalar_prefetch=0,
            grid=(1,),
            in_specs=[
                pl.BlockSpec((B, H), lambda i: (0, 0)),
                pl.BlockSpec((H, H), lambda i: (0, 0)),
                pl.BlockSpec((1, H), lambda i: (0, 0)),
                pl.BlockSpec((H, P), lambda i: (0, 0)),
                pl.BlockSpec((1, P), lambda i: (0, 0)),
            ],
            out_specs=pl.BlockSpec((B, P), lambda i: (0, 0)),
        ),
        compiler_params=pltpu.CompilerParams(dimension_semantics=("arbitrary",)),
    )(cls_tok, pool_w, pool_b.reshape(1, H), cls_w_pad, cls_b_pad.reshape(1, P))


# ---------------------------------------------------------------------------
# Deterministic parameter init (synthetic "bert-base-cased"-shaped weights)
# ---------------------------------------------------------------------------

def init_params(key):
    def nrm(k, shape, scale=0.02, dtype=jnp.bfloat16):
        return (jax.random.normal(k, shape, jnp.float32) * scale).astype(dtype)

    keys = jax.random.split(key, 8 + LAYERS)
    cls_w = nrm(keys[4], (HIDDEN, N_CLASSES))
    cls_w_pad = jnp.zeros((HIDDEN, LOGIT_PAD), jnp.bfloat16).at[:, :N_CLASSES].set(cls_w)

    p = {
        "word_emb": nrm(keys[0], (VOCAB, HIDDEN), dtype=jnp.float32),
        "pos_emb": nrm(keys[1], (MAX_POS, HIDDEN), dtype=jnp.float32),
        "type_emb": nrm(keys[2], (2, HIDDEN), dtype=jnp.float32),
        "emb_ln_g": jnp.ones((HIDDEN,), jnp.float32),
        "emb_ln_b": jnp.zeros((HIDDEN,), jnp.float32),
        "pool_w": nrm(keys[3], (HIDDEN, HIDDEN)),
        "pool_b": jnp.zeros((HIDDEN,), jnp.float32),
        "cls_w_pad": cls_w_pad,                             # (768, 128) lane-dense padded
        "cls_b_pad": jnp.zeros((LOGIT_PAD,), jnp.float32),
        "layers": [],
    }
    for li in range(LAYERS):
        lk = jax.random.split(keys[8 + li], 6)
        wq = nrm(lk[0], (HIDDEN, HIDDEN))
        wk = nrm(lk[1], (HIDDEN, HIDDEN))
        wv = nrm(lk[2], (HIDDEN, HIDDEN))
        p["layers"].append({
            "w_qkv": jnp.concatenate([wq, wk, wv], axis=1),  # fused (768, 2304) bf16
            "b_qkv": jnp.zeros((3 * HIDDEN,), jnp.float32),
            "wo": nrm(lk[3], (HIDDEN, HIDDEN)), "bo": jnp.zeros((HIDDEN,), jnp.float32),
            "ln1_g": jnp.ones((HIDDEN,), jnp.float32), "ln1_b": jnp.zeros((HIDDEN,), jnp.float32),
            "w1": nrm(lk[4], (HIDDEN, INTER)), "b1": jnp.zeros((INTER,), jnp.float32),
            "w2": nrm(lk[5], (INTER, HIDDEN)), "b2": jnp.zeros((HIDDEN,), jnp.float32),
            "ln2_g": jnp.ones((HIDDEN,), jnp.float32), "ln2_b": jnp.zeros((HIDDEN,), jnp.float32),
        })
    return p


# ---------------------------------------------------------------------------
# Forward pass: BERT encoder -> pooler -> dropout(eval) -> Linear(768,4) -> ReLU
# ---------------------------------------------------------------------------

def bert_classifier_forward(params, input_ids, mask):
    B, S = input_ids.shape
    H, nh, hd = HIDDEN, HEADS, HEAD_DIM
    M = B * S

    # Embeddings (gathers are JAX glue) + LayerNorm (Pallas, no dummy residual).
    x = (params["word_emb"][input_ids]
         + params["pos_emb"][:S][None, :, :]
         + params["type_emb"][0][None, None, :])
    x = layernorm(x.reshape(M, H), params["emb_ln_g"], params["emb_ln_b"])   # bf16 [M, 768]

    # Additive attention-mask bias, shape [B, 1, S]
    mask_bias = ((1.0 - mask.astype(jnp.float32)) * -10000.0).reshape(B, 1, S)

    def split_heads(t):
        return t.reshape(B, S, nh, hd).transpose(0, 2, 1, 3)   # [B, heads, S, hd]

    for lp in params["layers"]:
        # Fused QKV projection: one matmul with N = 2304.
        qkv = linear(x, lp["w_qkv"], lp["b_qkv"], tile_n=1152)
        q, k, v = qkv[:, :H], qkv[:, H:2 * H], qkv[:, 2 * H:]
        ctx = attention(split_heads(q), split_heads(k), split_heads(v), mask_bias)
        ctx = ctx.transpose(0, 2, 1, 3).reshape(M, H)
        # o-projection fused with residual add + LayerNorm1.
        x = linear_add_layernorm(ctx, lp["wo"], lp["bo"], x, lp["ln1_g"], lp["ln1_b"])
        # FFN: w1 + GELU, then w2 fused with residual add + LayerNorm2.
        h = linear(x, lp["w1"], lp["b1"], act="gelu", tile_n=512)
        x = linear_add_layernorm(h, lp["w2"], lp["b2"], x, lp["ln2_g"], lp["ln2_b"])

    cls_tok = x.reshape(B, S, H)[:, 0, :]                      # [B, 768] (CLS token)
    logits_pad = pooler_classifier(cls_tok, params["pool_w"], params["pool_b"],
                                   params["cls_w_pad"], params["cls_b_pad"])  # [B, 128] f32
    return logits_pad[:, :N_CLASSES]                           # [B, 4]


if __name__ == "__main__":
    key = jax.random.PRNGKey(0)
    pkey, ikey = jax.random.split(key)

    params = init_params(pkey)

    B, S = 2, 8
    input_ids = jax.random.randint(ikey, (B, S), 0, VOCAB, dtype=jnp.int32)
    mask = jnp.ones((B, S), dtype=jnp.int32)

    out = bert_classifier_forward(params, input_ids, mask)
    out = jax.block_until_ready(out)

    assert out.shape == (B, N_CLASSES)
    assert bool(jnp.all(out >= 0.0))          # ReLU output is non-negative
    print("KERNEL_OK")
</pallas_src>

<mosaic_0001>
module attributes {stable_mosaic.version = 11 : i64} {
  func.func @_ln_kernel(%arg0: i32, %arg1: memref<8x768xf32, #tpu.memory_space<vmem>>, %arg2: memref<1x768xf32, #tpu.memory_space<vmem>>, %arg3: memref<1x768xf32, #tpu.memory_space<vmem>>, %arg4: memref<8x768xbf16, #tpu.memory_space<vmem>>) attributes {dimension_semantics = [#tpu.dimension_semantics<parallel>], iteration_bounds = array<i64: 2>, scalar_prefetch = 0 : i64, scratch_operands = 0 : i64, tpu.core_type = #tpu.core_type<tc>, window_params = [{transform_indices = @transform_0, window_bounds = array<i64: 8, 768>}, {pipeline_mode = #tpu.pipeline_mode<synchronous>, transform_indices = @transform_1, window_bounds = array<i64: 1, 768>}, {pipeline_mode = #tpu.pipeline_mode<synchronous>, transform_indices = @transform_2, window_bounds = array<i64: 1, 768>}, {transform_indices = @transform_3, window_bounds = array<i64: 8, 768>}]} {
    %c0 = arith.constant 0 : index
    %c0_0 = arith.constant 0 : index
    %0 = vector.load %arg1[%c0, %c0_0] : memref<8x768xf32, #tpu.memory_space<vmem>>, vector<8x768xf32>
    %cst = arith.constant dense<0.000000e+00> : vector<8xf32>
    %1 = vector.multi_reduction <add>, %0, %cst [1] : vector<8x768xf32> to vector<8xf32>
    %2 = vector.shape_cast %1 : vector<8xf32> to vector<8x1xf32>
    %cst_1 = arith.constant 7.680000e+02 : f32
    %3 = vector.broadcast %cst_1 : f32 to vector<8x1xf32>
    %4 = arith.divf %2, %3 : vector<8x1xf32>
    %5 = vector.broadcast %4 : vector<8x1xf32> to vector<8x768xf32>
    %6 = arith.subf %0, %5 : vector<8x768xf32>
    %7 = arith.mulf %6, %6 : vector<8x768xf32>
    %cst_2 = arith.constant dense<0.000000e+00> : vector<8xf32>
    %8 = vector.multi_reduction <add>, %7, %cst_2 [1] : vector<8x768xf32> to vector<8xf32>
    %9 = vector.shape_cast %8 : vector<8xf32> to vector<8x1xf32>
    %cst_3 = arith.constant 7.680000e+02 : f32
    %10 = vector.broadcast %cst_3 : f32 to vector<8x1xf32>
    %11 = arith.divf %9, %10 : vector<8x1xf32>
    %cst_4 = arith.constant 9.99999996E-13 : f32
    %12 = vector.broadcast %cst_4 : f32 to vector<8x1xf32>
    %13 = arith.addf %11, %12 : vector<8x1xf32>
    %14 = math.rsqrt %13 : vector<8x1xf32>
    %15 = vector.broadcast %14 : vector<8x1xf32> to vector<8x768xf32>
    %16 = arith.mulf %6, %15 : vector<8x768xf32>
    %c0_5 = arith.constant 0 : index
    %c0_6 = arith.constant 0 : index
    %17 = vector.load %arg2[%c0_5, %c0_6] : memref<1x768xf32, #tpu.memory_space<vmem>>, vector<1x768xf32>
    %18 = vector.broadcast %17 : vector<1x768xf32> to vector<8x768xf32>
    %19 = arith.mulf %16, %18 : vector<8x768xf32>
    %c0_7 = arith.constant 0 : index
    %c0_8 = arith.constant 0 : index
    %20 = vector.load %arg3[%c0_7, %c0_8] : memref<1x768xf32, #tpu.memory_space<vmem>>, vector<1x768xf32>
    %21 = vector.broadcast %20 : vector<1x768xf32> to vector<8x768xf32>
    %22 = arith.addf %19, %21 : vector<8x768xf32>
    %23 = arith.truncf %22 : vector<8x768xf32> to vector<8x768xbf16>
    %c0_9 = arith.constant 0 : index
    %c0_10 = arith.constant 0 : index
    %24 = vector.load %arg4[%c0_9, %c0_10] : memref<8x768xbf16, #tpu.memory_space<vmem>>, vector<8x768xbf16>
    tpu.vector_store %arg4[%c0_9, %c0_10], %23 {strides = array<i32>} : memref<8x768xbf16, #tpu.memory_space<vmem>>, vector<8x768xbf16>,
    return
  }
  func.func @transform_0(%arg0: i32) -> (i32, i32) {
    %c0_i32 = arith.constant 0 : i32
    %c0_i32_0 = arith.constant 0 : i32
    return %arg0, %c0_i32 : i32, i32
  }
  func.func @transform_1(%arg0: i32) -> (i32, i32) {
    %c0_i32 = arith.constant 0 : i32
    %c0_i32_0 = arith.constant 0 : i32
    %c0_i32_1 = arith.constant 0 : i32
    return %c0_i32, %c0_i32_0 : i32, i32
  }
  func.func @transform_2(%arg0: i32) -> (i32, i32) {
    %c0_i32 = arith.constant 0 : i32
    %c0_i32_0 = arith.constant 0 : i32
    %c0_i32_1 = arith.constant 0 : i32
    return %c0_i32, %c0_i32_0 : i32, i32
  }
  func.func @transform_3(%arg0: i32) -> (i32, i32) {
    %c0_i32 = arith.constant 0 : i32
    %c0_i32_0 = arith.constant 0 : i32
    return %arg0, %c0_i32 : i32, i32
  }
}

</mosaic_0001>

<llo_original>
// kernel: tpu_custom_call.1
$region0: #{tpu_custom_call.1}
  #allocation0 [shape = 'u32[]', space=smem, size = 0x4, offset = 0x4, fixed_abs, tag = 'smem constant byte address 0x4 - core index']
  #allocation1 [shape = 'u32[144,128]{1,0:T(1,128)}', space=vmem, size = 0x12000, scoped, tag = 'internal scratch']
  %s0 = inlined_call_operand.hbm [shape: f32[16,768], index: 0, kind: input, shape index: {}]
  %s1 = inlined_call_operand.hbm [shape: f32[1,768], index: 1, kind: input, shape index: {}]
  %s2 = inlined_call_operand.hbm [shape: f32[1,768], index: 2, kind: input, shape index: {}]
  %s3 = inlined_call_operand.hbm [shape: bf16[16,768], index: 3, kind: output, shape index: {}]
  %s4 = sld [smem:[#allocation0]]
  $region57: #{tpu_custom_call.1} parent=0
    _
  %s6 = ssub.s32 1, %s4
  %s7 = scalar_select 0, %s6, %s4
  $region1: #{tpu_custom_call.1} parent=0
    #allocation2 [shape = 'u8[49152]{0}', space=vmem, size = 0xc000, scoped, tag = 'input window, operand 0']
    #allocation3 [shape = 's32[2]{0}', space=sflag, size = 0x8, scoped, tag = 'scoped memory for tpu_custom_call.1']
    #allocation4 [shape = 's32[2]{0}', space=sflag, size = 0x8, scoped, tag = 'scoped memory for tpu_custom_call.1']
    #allocation5 [shape = 'u8[3072]{0}', space=vmem, size = 0xc00, scoped, tag = 'input window, operand 1, single buffered']
    #allocation6 [shape = 's32[1]{0}', space=sflag, size = 0x4, scoped, tag = 'scoped memory for tpu_custom_call.1']
    #allocation7 [shape = 'u8[3072]{0}', space=vmem, size = 0xc00, scoped, tag = 'input window, operand 2, single buffered']
    #allocation8 [shape = 'u8[24576]{0}', space=vmem, size = 0x6000, scoped, tag = 'output window, operand 0']
    %8 = vsyncpa [#allocation3], 0
    %s9 = scalar_lea.sflag [#allocation3], 1
    %10 = vsyncpa %s9, 0
    %11 = vsyncpa [#allocation6], 0
    %12 = vsyncpa [#allocation4], 0
    %s13 = scalar_lea.sflag [#allocation4], 1
    %14 = vsyncpa %s13, 0
    loop: start=0, step=1, limit=4
    $region2: #{tpu_custom_call.1} parent=1 // loop_pre_header
      _
    $region3: #{tpu_custom_call.1} parent=1 // loop_header
      %s16 = sphi 0, %s20
      %p17 = scmp.ge.s32.totalorder %s16, 4
      %s26 = sphi 0, %s28
      %s29 = sphi 0, %s26
      %s30 = sphi 0, %s29
      %s46 = sphi 0, %s30
      %s50 = sphi 0, %s50
      %s52 = sphi 0, %s50
      %s53 = sphi 0, %s52
      %s67 = sphi 0, %s53
      %s71 = sphi 0, %s71
      %s73 = sphi 0, %s71
      %s74 = sphi 0, %s73
      %s88 = sphi 0, %s74
      %s94 = sphi 0, %s96
      %s97 = sphi 0, %s94
      %s98 = sphi 0, %s97
      %s114 = sphi 0, %s98
    $region4: #{tpu_custom_call.1} parent=1 // loop_header_branch
      %19 = sbr.rel (%p17) target = $region8
    $region5: #{tpu_custom_call.1} parent=1 // loop_body
      %s21 = ssub.s32 %s16, 1
      %s22 = ssub.s32 %s16, 2
      %s23 = sadd.s32 %s16, 1
      %s24 = ssub.s32 %s16, %s23
      %p25 = scmp.eq.s32.totalorder %s24, 0
      %s27 = sadd.s32 %s26, 1
      %s28 = scalar_select %p25, %s26, %s27
      %p31 = pneg %p25
      %p32 = scmp.eq.s32.totalorder %s16, 1
      %p33 = por %p31, %p32
      %p34 = scmp.ne.s32.totalorder %s26, %s29
      %p35 = scmp.eq.s32.totalorder %s16, 0
      %p36 = por %p34, %p35
      %p37 = scmp.ne.s32.totalorder %s26, %s29
      %p38 = scmp.eq.s32.totalorder %s21, 1
      %p39 = por %p37, %p38
      %p40 = scmp.ne.s32.totalorder %s29, %s30
      %p41 = scmp.eq.s32.totalorder %s21, 0
      %p42 = por %p40, %p41
      %p43 = scmp.ne.s32.totalorder %s29, %s30
      %p44 = scmp.eq.s32.totalorder %s22, 1
      %p45 = por %p43, %p44
      %p47 = scmp.ne.s32.totalorder %s30, %s46
      %p48 = scmp.eq.s32.totalorder %s22, 0
      %p49 = por %p47, %p48
      %s51 = sadd.s32 %s50, 1
      %p54 = scmp.eq.s32.totalorder %s16, 1
      %p55 = scmp.ne.s32.totalorder %s50, %s52
      %p56 = scmp.eq.s32.totalorder %s16, 0
      %p57 = por %p55, %p56
      %p58 = scmp.ne.s32.totalorder %s50, %s52
      %p59 = scmp.eq.s32.totalorder %s21, 1
      %p60 = por %p58, %p59
      %p61 = scmp.ne.s32.totalorder %s52, %s53
      %p62 = scmp.eq.s32.totalorder %s21, 0
      %p63 = por %p61, %p62
      %p64 = scmp.ne.s32.totalorder %s52, %s53
      %p65 = scmp.eq.s32.totalorder %s22, 1
      %p66 = por %p64, %p65
      %p68 = scmp.ne.s32.totalorder %s53, %s67
      %p69 = scmp.eq.s32.totalorder %s22, 0
      %p70 = por %p68, %p69
      %s72 = sadd.s32 %s71, 1
      %p75 = scmp.eq.s32.totalorder %s16, 1
      %p76 = scmp.ne.s32.totalorder %s71, %s73
      %p77 = scmp.eq.s32.totalorder %s16, 0
      %p78 = por %p76, %p77
      %p79 = scmp.ne.s32.totalorder %s71, %s73
      %p80 = scmp.eq.s32.totalorder %s21, 1
      %p81 = por %p79, %p80
      %p82 = scmp.ne.s32.totalorder %s73, %s74
      %p83 = scmp.eq.s32.totalorder %s21, 0
      %p84 = por %p82, %p83
      %p85 = scmp.ne.s32.totalorder %s73, %s74
      %p86 = scmp.eq.s32.totalorder %s22, 1
      %p87 = por %p85, %p86
      %p89 = scmp.ne.s32.totalorder %s74, %s88
      %p90 = scmp.eq.s32.totalorder %s22, 0
      %p91 = por %p89, %p90
      %s92 = ssub.s32 %s16, %s23
      %p93 = scmp.eq.s32.totalorder %s92, 0
      %s95 = sadd.s32 %s94, 1
      %s96 = scalar_select %p93, %s94, %s95
      %p99 = pneg %p93
      %p100 = scmp.eq.s32.totalorder %s16, 1
      %p101 = por %p99, %p100
      %p102 = scmp.ne.s32.totalorder %s94, %s97
      %p103 = scmp.eq.s32.totalorder %s16, 0
      %p104 = por %p102, %p103
      %p105 = scmp.ne.s32.totalorder %s94, %s97
      %p106 = scmp.eq.s32.totalorder %s21, 1
      %p107 = por %p105, %p106
      %p108 = scmp.ne.s32.totalorder %s97, %s98
      %p109 = scmp.eq.s32.totalorder %s21, 0
      %p110 = por %p108, %p109
      %p111 = scmp.ne.s32.totalorder %s97, %s98
      %p112 = scmp.eq.s32.totalorder %s22, 1
      %p113 = por %p111, %p112
      %p115 = scmp.ne.s32.totalorder %s98, %s114
      %p116 = scmp.eq.s32.totalorder %s22, 0
      %p117 = por %p115, %p116
      %p118 = scmp.le.s32.totalorder 1, %s16
      %p119 = scmp.lt.s32.totalorder %s16, 3
      %p120 = pnand %p118, %p119
      %p121 = pneg %p120
      // Predicated region
      $region9: #{tpu_custom_call.1} parent=5 // pred_check
        _
      $region10: #{tpu_custom_call.1} parent=5 // pred_check_branch
        %123 = sbr.rel (%p120) target = $region12
      $region11: #{tpu_custom_call.1} parent=5 // pred_region
        %s124 = ssub.s32 %s16, 1
        // Predicated region
        $region13: #{tpu_custom_call.1} parent=11 // pred_check
          %p125 = pneg %p63
        $region14: #{tpu_custom_call.1} parent=11 // pred_check_branch
          %127 = sbr.rel (%p125) target = $region16
        $region15: #{tpu_custom_call.1} parent=11 // pred_region
          %s129 = ssub.s32 96, 96
          %130 = vsyncadd [#allocation6], %s129
          %s132 = sshll.u32 [#allocation5], 4
          %s133 = int_to_ptr.vmem [resolvable:$true] %s132
          %135 = dma.hbm_to_vmem [thread:$0]  %s1, 96, %s133, [#allocation6]
        $region16: #{tpu_custom_call.1} parent=11 // pred_fallthru
          _
        // Predicated region
        $region17: #{tpu_custom_call.1} parent=11 // pred_check
          %p136 = pneg %p84
        $region18: #{tpu_custom_call.1} parent=11 // pred_check_branch
          %138 = sbr.rel (%p136) target = $region20
        $region19: #{tpu_custom_call.1} parent=11 // pred_region
          %s140 = ssub.s32 96, 96
          %141 = vsyncadd [#allocation6], %s140
          %s143 = sshll.u32 [#allocation7], 4
          %s144 = int_to_ptr.vmem [resolvable:$true] %s143
          %146 = dma.hbm_to_vmem [thread:$0]  %s2, 96, %s144, [#allocation6]
        $region20: #{tpu_custom_call.1} parent=11 // pred_fallthru
          _
      $region12: #{tpu_custom_call.1} parent=5 // pred_fallthru
        _
      %p147 = scmp.lt.s32.totalorder %s16, 2
      // Predicated region
      $region21: #{tpu_custom_call.1} parent=5 // pred_check
        %p148 = pneg %p147
      $region22: #{tpu_custom_call.1} parent=5 // pred_check_branch
        %150 = sbr.rel (%p148) target = $region24
      $region23: #{tpu_custom_call.1} parent=5 // pred_region
        // Predicated region
        $region25: #{tpu_custom_call.1} parent=23 // pred_check
          %p151 = pneg %p36
        $region26: #{tpu_custom_call.1} parent=23 // pred_check_branch
          %153 = sbr.rel (%p151) target = $region28
        $region27: #{tpu_custom_call.1} parent=23 // pred_region
          %s154 = sand.u32 %s26, 1
          %s155 = scalar_lea.sflag [#allocation3], %s154
          %s156 = sand.u32 %s26, 1
          %s157 = smul.addr %s156, 48
          %s158 = scalar_lea.vmem [#allocation2], %s157
          %s160 = ssub.s32 768, 768
          %161 = vsyncadd %s155, %s160
          %s162 = smul.addr %s16, 6
          %s163 = smul.addr %s162, 128
          %s164 = scalar_lea.hbm %s0, %s163
          %s166 = sshll.u32 %s158, 4
          %s167 = int_to_ptr.vmem [resolvable:$true] %s166
          %169 = dma.hbm_to_vmem [thread:$0]  %s164, 768, %s167, %s155
        $region28: #{tpu_custom_call.1} parent=23 // pred_fallthru
          _
      $region24: #{tpu_custom_call.1} parent=5 // pred_fallthru
        _
      %p170 = scmp.le.s32.totalorder 1, %s16
      %p171 = scmp.lt.s32.totalorder %s16, 3
      %p172 = pnand %p170, %p171
      %p173 = pneg %p172
      // Predicated region
      $region29: #{tpu_custom_call.1} parent=5 // pred_check
        _
      $region30: #{tpu_custom_call.1} parent=5 // pred_check_branch
        %175 = sbr.rel (%p172) target = $region32
      $region31: #{tpu_custom_call.1} parent=5 // pred_region
        %s176 = ssub.s32 %s16, 1
        %s177 = sand.u32 %s29, 1
        %s178 = scalar_lea.sflag [#allocation3], %s177
        %s179 = sand.u32 %s29, 1
        %s180 = smul.addr %s179, 48
        %s181 = scalar_lea.vmem [#allocation2], %s180
        // Predicated region
        $region33: #{tpu_custom_call.1} parent=31 // pred_check
          %p182 = pneg %p42
        $region34: #{tpu_custom_call.1} parent=31 // pred_check_branch
          %184 = sbr.rel (%p182) target = $region36
        $region35: #{tpu_custom_call.1} parent=31 // pred_region
          %185 = dma.done %s178, 768
        $region36: #{tpu_custom_call.1} parent=31 // pred_fallthru
          _
        // Predicated region
        $region37: #{tpu_custom_call.1} parent=31 // pred_check
          %p186 = pneg %p63
        $region38: #{tpu_custom_call.1} parent=31 // pred_check_branch
          %188 = sbr.rel (%p186) target = $region40
        $region39: #{tpu_custom_call.1} parent=31 // pred_region
          %189 = dma.done [#allocation6], 96
        $region40: #{tpu_custom_call.1} parent=31 // pred_fallthru
          _
        // Predicated region
        $region41: #{tpu_custom_call.1} parent=31 // pred_check
          %p190 = pneg %p84
        $region42: #{tpu_custom_call.1} parent=31 // pred_check_branch
          %192 = sbr.rel (%p190) target = $region44
        $region43: #{tpu_custom_call.1} parent=31 // pred_region
          %193 = dma.done [#allocation6], 96
        $region44: #{tpu_custom_call.1} parent=31 // pred_fallthru
          _
        %s194 = sand.u32 %s29, 1
        %s195 = scalar_lea.sflag [#allocation3], %s194
        %s196 = sand.u32 %s29, 1
        %s197 = smul.addr %s196, 48
        %s198 = scalar_lea.vmem [#allocation2], %s197
        %p199 = pneg %p42
        %p200 = pneg %p39
        %p201 = pneg %p63
        %p202 = pneg %p60
        %p203 = pneg %p84
        %p204 = pneg %p81
        %p205 = pneg %p110
        %p206 = pneg %p107
        %s207 = sand.u32 %s97, 1
        %s208 = scalar_lea.sflag [#allocation4], %s207
        %s209 = sand.u32 %s97, 1
        %s210 = smul.addr %s209, 24
        %s211 = scalar_lea.vmem [#allocation8], %s210
        %v212 = vld [vmem:[%s181] sm:$0xff]
        %v213 = vld [vmem:[%s181 + $0x8] sm:$0xff]
        %v214 = vld [vmem:[%s181 + $0x10] sm:$0xff]
        %v215 = vld [vmem:[%s181 + $0x18] sm:$0xff]
        %v216 = vld [vmem:[%s181 + $0x20] sm:$0xff]
        %v217 = vld [vmem:[%s181 + $0x28] sm:$0xff]
        %v218 = vadd.f32 %v212, %v213
        %v219 = vadd.f32 %v218, %v214
        %v220 = vadd.f32 %v219, %v215
        %v221 = vadd.f32 %v220, %v216
        %v222 = vadd.f32 %v221, %v217
        %223 = vadd.xlane.f32.xlu0 %v222
        %v224 = vpop.xlane.xlu0 %223
        %v225 = vrcp.pop 768.0
        %v226 = vmul.f32 %v224, %v225
        %v227 = vsub.f32 %v212, %v226
        %v228 = vsub.f32 %v213, %v226
        %v229 = vsub.f32 %v214, %v226
        %v230 = vsub.f32 %v215, %v226
        %v231 = vsub.f32 %v216, %v226
        %v232 = vsub.f32 %v217, %v226
        %v233 = vmul.f32 %v227, %v227
        %v234 = vmul.f32 %v228, %v228
        %v235 = vmul.f32 %v229, %v229
        %v236 = vmul.f32 %v230, %v230
        %v237 = vmul.f32 %v231, %v231
        %v238 = vmul.f32 %v232, %v232
        %v239 = vadd.f32 %v233, %v234
        %v240 = vadd.f32 %v239, %v235
        %v241 = vadd.f32 %v240, %v236
        %v242 = vadd.f32 %v241, %v237
        %v243 = vadd.f32 %v242, %v238
        %244 = vadd.xlane.f32.xlu0 %v243
        %v245 = vpop.xlane.xlu0 %244
        %v246 = vmul.f32 %v245, %v225
        %v247 = vadd.f32 %v246, 1e-12
        %v248 = vrsqrt.pop %v247
        %v249 = vmul.f32 %v227, %v248
        %v250 = vmul.f32 %v228, %v248
        %v251 = vmul.f32 %v229, %v248
        %v252 = vmul.f32 %v230, %v248
        %v253 = vmul.f32 %v231, %v248
        %v254 = vmul.f32 %v232, %v248
        %v255 = vld [vmem:[#allocation5] sm:$0x3f]
        %v257 = vlaneseq
        %v258 = vshrl.u32 %v257, 7
        %v259 = vsub.s32 0, %v258
        %v260 = vrot.slane %v255, %v259
        %v261 = vlaneseq
        %v262 = vshrl.u32 %v261, 7
        %v263 = vsub.s32 1, %v262
        %v264 = vrot.slane %v255, %v263
        %v265 = vlaneseq
        %v266 = vshrl.u32 %v265, 7
        %v267 = vsub.s32 2, %v266
        %v268 = vrot.slane %v255, %v267
        %v269 = vlaneseq
        %v270 = vshrl.u32 %v269, 7
        %v271 = vsub.s32 3, %v270
        %v272 = vrot.slane %v255, %v271
        %v273 = vlaneseq
        %v274 = vshrl.u32 %v273, 7
        %v275 = vsub.s32 4, %v274
        %v276 = vrot.slane %v255, %v275
        %v277 = vlaneseq
        %v278 = vshrl.u32 %v277, 7
        %v279 = vsub.s32 5, %v278
        %v280 = vrot.slane %v255, %v279
        %v287 = vmul.f32 %v249, %v260
        %v288 = vmul.f32 %v250, %v264
        %v289 = vmul.f32 %v251, %v268
        %v290 = vmul.f32 %v252, %v272
        %v291 = vmul.f32 %v253, %v276
        %v292 = vmul.f32 %v254, %v280
        %v293 = vld [vmem:[#allocation7] sm:$0x3f]
        %v295 = vlaneseq
        %v296 = vshrl.u32 %v295, 7
        %v297 = vsub.s32 0, %v296
        %v298 = vrot.slane %v293, %v297
        %v299 = vlaneseq
        %v300 = vshrl.u32 %v299, 7
        %v301 = vsub.s32 1, %v300
        %v302 = vrot.slane %v293, %v301
        %v303 = vlaneseq
        %v304 = vshrl.u32 %v303, 7
        %v305 = vsub.s32 2, %v304
        %v306 = vrot.slane %v293, %v305
        %v307 = vlaneseq
        %v308 = vshrl.u32 %v307, 7
        %v309 = vsub.s32 3, %v308
        %v310 = vrot.slane %v293, %v309
        %v311 = vlaneseq
        %v312 = vshrl.u32 %v311, 7
        %v313 = vsub.s32 4, %v312
        %v314 = vrot.slane %v293, %v313
        %v315 = vlaneseq
        %v316 = vshrl.u32 %v315, 7
        %v317 = vsub.s32 5, %v316
        %v318 = vrot.slane %v293, %v317
        %v325 = vadd.f32 %v287, %v298
        %v326 = vadd.f32 %v288, %v302
        %v327 = vadd.f32 %v289, %v306
        %v328 = vadd.f32 %v290, %v310
        %v329 = vadd.f32 %v291, %v314
        %v330 = vadd.f32 %v292, %v318
        %v331 = vpack.c.bf16 %v325, %v325
        %v332 = vpack.c.bf16 %v326, %v326
        %v333 = vpack.c.bf16 %v327, %v327
        %v334 = vpack.c.bf16 %v328, %v328
        %v335 = vpack.c.bf16 %v329, %v329
        %v336 = vpack.c.bf16 %v330, %v330
        %v343 = vunpack.c.l.b16 %v331
        %v344 = vunpack.c.l.b16 %v332
        %v345 = vunpack.c.l.b16 %v333
        %v346 = vunpack.c.l.b16 %v334
        %v347 = vunpack.c.l.b16 %v335
        %v348 = vunpack.c.l.b16 %v336
        %v349 = vpack.c.b16 %v344, %v343
        %v350 = vpack.c.b16 %v346, %v345
        %v351 = vpack.c.b16 %v348, %v347
        %355 = vst [vmem:[%s211] sm:$0xff] %v349
        %356 = vst [vmem:[%s211 + $0x8] sm:$0xff] %v350
        %357 = vst [vmem:[%s211 + $0x10] sm:$0xff] %v351
        %s358 = sand.u32 %s97, 1
        %s359 = scalar_lea.sflag [#allocation4], %s358
        %s360 = sand.u32 %s97, 1
        %s361 = smul.addr %s360, 24
        %s362 = scalar_lea.vmem [#allocation8], %s361
        // Predicated region
        $region45: #{tpu_custom_call.1} parent=31 // pred_check
          %p363 = pneg %p107
        $region46: #{tpu_custom_call.1} parent=31 // pred_check_branch
          %365 = sbr.rel (%p363) target = $region48
        $region47: #{tpu_custom_call.1} parent=31 // pred_region
          %s367 = ssub.s32 384, 384
          %368 = vsyncadd %s359, %s367
          %s369 = smul.addr %s21, 6
          %s370 = smul.addr %s369, 64
          %s371 = scalar_lea.hbm %s3, %s370
          %s373 = sshll.u32 %s362, 4
          %s374 = int_to_ptr.vmem [resolvable:$true] %s373
          %376 = dma.vmem_to_hbm [thread:$0]  %s374, 384, %s371, %s359
        $region48: #{tpu_custom_call.1} parent=31 // pred_fallthru
          _
      $region32: #{tpu_custom_call.1} parent=5 // pred_fallthru
        _
      %p377 = scmp.le.s32.totalorder 2, %s16
      // Predicated region
      $region49: #{tpu_custom_call.1} parent=5 // pred_check
        %p378 = pneg %p377
      $region50: #{tpu_custom_call.1} parent=5 // pred_check_branch
        %380 = sbr.rel (%p378) target = $region52
      $region51: #{tpu_custom_call.1} parent=5 // pred_region
        %s381 = ssub.s32 %s16, 2
        // Predicated region
        $region53: #{tpu_custom_call.1} parent=51 // pred_check
          %p382 = pneg %p113
        $region54: #{tpu_custom_call.1} parent=51 // pred_check_branch
          %384 = sbr.rel (%p382) target = $region56
        $region55: #{tpu_custom_call.1} parent=51 // pred_region
          %s385 = sand.u32 %s98, 1
          %s386 = scalar_lea.sflag [#allocation4], %s385
          %s387 = sand.u32 %s98, 1
          %s388 = smul.addr %s387, 24
          %s389 = scalar_lea.vmem [#allocation8], %s388
          %390 = dma.done %s386, 384
        $region56: #{tpu_custom_call.1} parent=51 // pred_fallthru
          _
      $region52: #{tpu_custom_call.1} parent=5 // pred_fallthru
        _
    $region6: #{tpu_custom_call.1} parent=1 // loop_footer
      %s20 = sadd.s32 1, %s16
    $region7: #{tpu_custom_call.1} parent=1 // loop_footer_branch
      %15 = sbr.rel target = $region3
    $region8: #{tpu_custom_call.1} parent=1 // loop_exit
      _
    %391 = vsyncpa [#allocation3], 1
    %s392 = scalar_lea.sflag [#allocation3], 1
    %393 = vsyncpa %s392, 1
    %394 = vsyncpa [#allocation6], 1
    %395 = vsyncpa [#allocation4], 1
    %s396 = scalar_lea.sflag [#allocation4], 1
    %397 = vsyncpa %s396, 1

</llo_original>
